<compile_context>
chip_gen: v5e
topology: v5e:2x2
jax: 0.10.0
libtpu: 0.0.40
codegen_flags: <defaults>
</compile_context>

<pallas_src>
import jax
import jax.numpy as jnp
from jax.experimental import pallas as pl
from jax.experimental.pallas import tpu as pltpu


# ---------------------------------------------------------------------------
# Kernel
# ---------------------------------------------------------------------------
def rcost_kernel(xbp_ref, dlt_ref, s0_ref, t_ref, a_ref, pref_ref, o_ref):
    """One (block_rows, block_cols) tile of  out = PLF(tail_wind) + preference*A.

    xbp (M+1,), dlt (M,), s0 (1,) are tiny f32 tables in SMEM (scalar prefetch).
    t_ref / a_ref / pref_ref / o_ref are f32 VMEM tiles.
    """
    t = t_ref[...]
    M = xbp_ref.shape[0] - 1               # number of PLF segments (static)

    # Hinge-sum form of the piecewise-linear function.
    plf = s0_ref[0] * (t - xbp_ref[0])     # base-slope term (covers t < x0 too)
    for j in range(1, M):                  # tiny static unroll over interior knots
        plf = plf + dlt_ref[j - 1] * jnp.maximum(t - xbp_ref[j], 0.0)

    o_ref[...] = plf + pref_ref[...] * a_ref[...]


# ---------------------------------------------------------------------------
# Tiling heuristic
# ---------------------------------------------------------------------------
def _pick_blocks(R, C, *, per_array_bytes=2 << 20):
    """Pick (block_rows, block_cols): ~per_array_bytes of f32 per streamed array.

    Columns stay un-tiled (full C, lane-dense when C % 128 == 0) unless even an
    8-row stripe would exceed the per-block budget, in which case columns are
    tiled in multiples of 128.  Rows are multiples of 8 (or the full R).
    """
    if 8 * 4 * C <= per_array_bytes:
        bc = C
    else:
        bc = min(C, max(128, (per_array_bytes // (4 * 8)) // 128 * 128))
    rows = per_array_bytes // (4 * bc)
    if R <= 8:
        br = R
    else:
        br = min(R, max(8, (rows // 8) * 8))
    return int(br), int(bc)


# ---------------------------------------------------------------------------
# Wrapper (mirrors RCost.forward)
# ---------------------------------------------------------------------------
def rcost_forward(tail_wind, A, preference, x_bp, theta, s0, eps=1e-4,
                  *, block_rows=None, block_cols=None):
    tail_wind = tail_wind.astype(jnp.float32)
    A = A.astype(jnp.float32)
    preference = preference.astype(jnp.float32)

    # Tiny parameter-space prep (plain JAX glue, O(M) work).
    deltas = jax.nn.softplus(theta.astype(jnp.float32)) + jnp.float32(eps)   # (M,)
    s0_arr = jnp.asarray(s0, jnp.float32).reshape(1)                         # (1,)
    x_bp = jnp.asarray(x_bp, jnp.float32)                                    # (M+1,)

    R, C = tail_wind.shape
    br_auto, bc_auto = _pick_blocks(R, C)
    br = br_auto if block_rows is None else int(block_rows)
    bc = bc_auto if block_cols is None else int(block_cols)
    grid = (pl.cdiv(R, br), pl.cdiv(C, bc))          # remainder blocks are fine

    # index_maps receive (grid indices..., *scalar_prefetch_refs).
    spec2d = pl.BlockSpec((br, bc), lambda i, j, xb, dl, s0r: (i, j))

    M = int(x_bp.shape[0]) - 1
    cost = pl.CostEstimate(
        flops=int(R) * int(C) * (4 * max(M - 1, 0) + 4),
        transcendentals=0,
        bytes_accessed=4 * 4 * int(R) * int(C),      # 3 reads + 1 write, f32
    )

    return pl.pallas_call(
        rcost_kernel,
        out_shape=jax.ShapeDtypeStruct((R, C), jnp.float32),
        grid_spec=pltpu.PrefetchScalarGridSpec(
            num_scalar_prefetch=3,
            grid=grid,
            in_specs=[spec2d, spec2d, spec2d],
            out_specs=spec2d,
        ),
        compiler_params=pltpu.CompilerParams(
            dimension_semantics=("parallel", "parallel"),
        ),
        cost_estimate=cost,
    )(x_bp, deltas, s0_arr, tail_wind, A, preference)


# ---------------------------------------------------------------------------
# Pure-JAX mirror of the PyTorch forward (bucketize + gather form)
# ---------------------------------------------------------------------------
def rcost_reference(tail_wind, A, preference, x_bp, theta, s0, eps=1e-4):
    deltas = jax.nn.softplus(theta) + eps
    slopes = jnp.cumsum(jnp.concatenate(
        [jnp.asarray(s0, jnp.float32).reshape(1), deltas]))
    idx = jnp.searchsorted(x_bp, tail_wind, side="left") - 1
    idx = jnp.clip(idx, 0, x_bp.shape[0] - 2)
    h = tail_wind - x_bp[idx]
    f_xi = jnp.cumsum(jnp.concatenate(
        [jnp.zeros((1,), jnp.float32), slopes[:-1] * jnp.diff(x_bp)]))
    plf = f_xi[idx] + slopes[idx] * h
    return plf + preference * A


# ---------------------------------------------------------------------------
# Self-test
# ---------------------------------------------------------------------------
def _run_case(key, R, C, breakpoints, block_rows=None, block_cols=None):
    k_t, k_a, k_th, k_p = jax.random.split(key, 4)
    M = breakpoints.shape[0] - 1
    theta = 0.3 * jax.random.normal(k_th, (M,), jnp.float32)
    s0 = jnp.float32(0.1)
    A = (jax.random.uniform(k_a, (R, C)) > 0.5).astype(jnp.float32)
    preference = 0.05 * jax.random.normal(k_p, (R, C), jnp.float32)
    tail_wind = jax.random.uniform(k_t, (R, C), jnp.float32,
                                   minval=-3.0, maxval=4.0)

    out = rcost_forward(tail_wind, A, preference, breakpoints, theta, s0,
                        block_rows=block_rows, block_cols=block_cols)
    out = jax.block_until_ready(out)

    ref = rcost_reference(tail_wind, A, preference, breakpoints, theta, s0)
    assert out.shape == (R, C) and out.dtype == jnp.float32
    assert jnp.allclose(out, ref, atol=1e-5, rtol=1e-5), \
        f"max abs err {jnp.max(jnp.abs(out - ref))}"


if __name__ == "__main__":
    breakpoints = jnp.array([-2.0, -1.0, 0.0, 1.0, 2.0, 3.0], jnp.float32)

    # Small base case (single block, lane-dense C).
    _run_case(jax.random.PRNGKey(0), 16, 128, breakpoints)

    # Multi-step row grid with a row remainder (40 rows, 16-row blocks).
    _run_case(jax.random.PRNGKey(1), 40, 256, breakpoints, block_rows=16)

    # 2-D grid with partial row AND column edge blocks (C=200, 128-wide tiles).
    _run_case(jax.random.PRNGKey(2), 24, 200, breakpoints,
              block_rows=16, block_cols=128)

    print("KERNEL_OK")
</pallas_src>

<mosaic_0001>
module attributes {stable_mosaic.version = 11 : i64} {
  func.func @rcost_kernel(%arg0: i32, %arg1: i32, %arg2: memref<6xf32, #tpu.memory_space<smem>>, %arg3: memref<5xf32, #tpu.memory_space<smem>>, %arg4: memref<1xf32, #tpu.memory_space<smem>>, %arg5: memref<16x128xf32, #tpu.memory_space<vmem>>, %arg6: memref<16x128xf32, #tpu.memory_space<vmem>>, %arg7: memref<16x128xf32, #tpu.memory_space<vmem>>, %arg8: memref<16x128xf32, #tpu.memory_space<vmem>>) attributes {dimension_semantics = [#tpu.dimension_semantics<parallel>, #tpu.dimension_semantics<parallel>], iteration_bounds = array<i64: 1, 1>, scalar_prefetch = 3 : i64, scratch_operands = 0 : i64, tpu.core_type = #tpu.core_type<tc>, window_params = [{transform_indices = @transform_0, window_bounds = array<i64: 16, 128>}, {transform_indices = @transform_1, window_bounds = array<i64: 16, 128>}, {transform_indices = @transform_2, window_bounds = array<i64: 16, 128>}, {transform_indices = @transform_3, window_bounds = array<i64: 16, 128>}]} {
    %c0 = arith.constant 0 : index
    %c0_0 = arith.constant 0 : index
    %0 = vector.load %arg5[%c0, %c0_0] : memref<16x128xf32, #tpu.memory_space<vmem>>, vector<16x128xf32>
    %c0_1 = arith.constant 0 : index
    %1 = memref.load %arg4[%c0_1] : memref<1xf32, #tpu.memory_space<smem>>
    %c0_2 = arith.constant 0 : index
    %2 = memref.load %arg2[%c0_2] : memref<6xf32, #tpu.memory_space<smem>>
    %3 = vector.broadcast %2 : f32 to vector<16x128xf32>
    %4 = arith.subf %0, %3 : vector<16x128xf32>
    %5 = vector.broadcast %1 : f32 to vector<16x128xf32>
    %6 = arith.mulf %5, %4 : vector<16x128xf32>
    %c0_3 = arith.constant 0 : index
    %7 = memref.load %arg3[%c0_3] : memref<5xf32, #tpu.memory_space<smem>>
    %c1 = arith.constant 1 : index
    %8 = memref.load %arg2[%c1] : memref<6xf32, #tpu.memory_space<smem>>
    %9 = vector.broadcast %8 : f32 to vector<16x128xf32>
    %10 = arith.subf %0, %9 : vector<16x128xf32>
    %cst = arith.constant 0.000000e+00 : f32
    %11 = vector.broadcast %cst : f32 to vector<16x128xf32>
    %12 = arith.maximumf %10, %11 : vector<16x128xf32>
    %13 = vector.broadcast %7 : f32 to vector<16x128xf32>
    %14 = arith.mulf %13, %12 : vector<16x128xf32>
    %15 = arith.addf %6, %14 : vector<16x128xf32>
    %c1_4 = arith.constant 1 : index
    %16 = memref.load %arg3[%c1_4] : memref<5xf32, #tpu.memory_space<smem>>
    %c2 = arith.constant 2 : index
    %17 = memref.load %arg2[%c2] : memref<6xf32, #tpu.memory_space<smem>>
    %18 = vector.broadcast %17 : f32 to vector<16x128xf32>
    %19 = arith.subf %0, %18 : vector<16x128xf32>
    %cst_5 = arith.constant 0.000000e+00 : f32
    %20 = vector.broadcast %cst_5 : f32 to vector<16x128xf32>
    %21 = arith.maximumf %19, %20 : vector<16x128xf32>
    %22 = vector.broadcast %16 : f32 to vector<16x128xf32>
    %23 = arith.mulf %22, %21 : vector<16x128xf32>
    %24 = arith.addf %15, %23 : vector<16x128xf32>
    %c2_6 = arith.constant 2 : index
    %25 = memref.load %arg3[%c2_6] : memref<5xf32, #tpu.memory_space<smem>>
    %c3 = arith.constant 3 : index
    %26 = memref.load %arg2[%c3] : memref<6xf32, #tpu.memory_space<smem>>
    %27 = vector.broadcast %26 : f32 to vector<16x128xf32>
    %28 = arith.subf %0, %27 : vector<16x128xf32>
    %cst_7 = arith.constant 0.000000e+00 : f32
    %29 = vector.broadcast %cst_7 : f32 to vector<16x128xf32>
    %30 = arith.maximumf %28, %29 : vector<16x128xf32>
    %31 = vector.broadcast %25 : f32 to vector<16x128xf32>
    %32 = arith.mulf %31, %30 : vector<16x128xf32>
    %33 = arith.addf %24, %32 : vector<16x128xf32>
    %c3_8 = arith.constant 3 : index
    %34 = memref.load %arg3[%c3_8] : memref<5xf32, #tpu.memory_space<smem>>
    %c4 = arith.constant 4 : index
    %35 = memref.load %arg2[%c4] : memref<6xf32, #tpu.memory_space<smem>>
    %36 = vector.broadcast %35 : f32 to vector<16x128xf32>
    %37 = arith.subf %0, %36 : vector<16x128xf32>
    %cst_9 = arith.constant 0.000000e+00 : f32
    %38 = vector.broadcast %cst_9 : f32 to vector<16x128xf32>
    %39 = arith.maximumf %37, %38 : vector<16x128xf32>
    %40 = vector.broadcast %34 : f32 to vector<16x128xf32>
    %41 = arith.mulf %40, %39 : vector<16x128xf32>
    %42 = arith.addf %33, %41 : vector<16x128xf32>
    %c0_10 = arith.constant 0 : index
    %c0_11 = arith.constant 0 : index
    %43 = vector.load %arg7[%c0_10, %c0_11] : memref<16x128xf32, #tpu.memory_space<vmem>>, vector<16x128xf32>
    %c0_12 = arith.constant 0 : index
    %c0_13 = arith.constant 0 : index
    %44 = vector.load %arg6[%c0_12, %c0_13] : memref<16x128xf32, #tpu.memory_space<vmem>>, vector<16x128xf32>
    %45 = arith.mulf %43, %44 : vector<16x128xf32>
    %46 = arith.addf %42, %45 : vector<16x128xf32>
    %c0_14 = arith.constant 0 : index
    %c0_15 = arith.constant 0 : index
    %47 = vector.load %arg8[%c0_14, %c0_15] : memref<16x128xf32, #tpu.memory_space<vmem>>, vector<16x128xf32>
    tpu.vector_store %arg8[%c0_14, %c0_15], %46 {strides = array<i32>} : memref<16x128xf32, #tpu.memory_space<vmem>>, vector<16x128xf32>,
    return
  }
  func.func @transform_0(%arg0: i32, %arg1: i32, %arg2: memref<6xf32, #tpu.memory_space<smem>>, %arg3: memref<5xf32, #tpu.memory_space<smem>>, %arg4: memref<1xf32, #tpu.memory_space<smem>>) -> (i32, i32) {
    %c0_i32 = arith.constant 0 : i32
    return %arg0, %arg1 : i32, i32
  }
  func.func @transform_1(%arg0: i32, %arg1: i32, %arg2: memref<6xf32, #tpu.memory_space<smem>>, %arg3: memref<5xf32, #tpu.memory_space<smem>>, %arg4: memref<1xf32, #tpu.memory_space<smem>>) -> (i32, i32) {
    %c0_i32 = arith.constant 0 : i32
    return %arg0, %arg1 : i32, i32
  }
  func.func @transform_2(%arg0: i32, %arg1: i32, %arg2: memref<6xf32, #tpu.memory_space<smem>>, %arg3: memref<5xf32, #tpu.memory_space<smem>>, %arg4: memref<1xf32, #tpu.memory_space<smem>>) -> (i32, i32) {
    %c0_i32 = arith.constant 0 : i32
    return %arg0, %arg1 : i32, i32
  }
  func.func @transform_3(%arg0: i32, %arg1: i32, %arg2: memref<6xf32, #tpu.memory_space<smem>>, %arg3: memref<5xf32, #tpu.memory_space<smem>>, %arg4: memref<1xf32, #tpu.memory_space<smem>>) -> (i32, i32) {
    %c0_i32 = arith.constant 0 : i32
    return %arg0, %arg1 : i32, i32
  }
}

</mosaic_0001>

<llo_original>
// kernel: tpu_custom_call.1
$region0: #{tpu_custom_call.1}
  #allocation0 [shape = 'u32[]', space=smem, size = 0x4, offset = 0x4, fixed_abs, tag = 'smem constant byte address 0x4 - core index']
  #allocation1 [shape = 'u32[72,128]{1,0:T(1,128)}', space=vmem, size = 0x9000, scoped, tag = 'internal scratch']
  #allocation2 [shape = 's32[1]{0}', space=sflag, size = 0x4, scoped, tag = 'scoped memory for tpu_custom_call.1']
  #allocation3 [shape = 'u8[512]{0}', space=smem, size = 0x200, scoped, tag = 'prefetched SMEM operand 0']
  #allocation4 [shape = 'u8[512]{0}', space=smem, size = 0x200, scoped, tag = 'prefetched SMEM operand 1']
  #allocation5 [shape = 'f32[1]{0:T(128)S(6)}', space=smem, size = 0x200, scoped, tag = 'prefetched SMEM operand 2']
  %s0 = inlined_call_operand.vmem [shape: f32[6], index: 0, kind: input, shape index: {}]
  %s1 = inlined_call_operand.vmem [shape: f32[5], index: 1, kind: input, shape index: {}]
  %s2 = inlined_call_operand.<no memory space> [shape: f32[1], index: 2, kind: input, shape index: {}]
  %s3 = inlined_call_operand.hbm [shape: f32[16,128], index: 3, kind: input, shape index: {}]
  %s4 = inlined_call_operand.hbm [shape: f32[16,128], index: 4, kind: input, shape index: {}]
  %s5 = inlined_call_operand.hbm [shape: f32[16,128], index: 5, kind: input, shape index: {}]
  %s6 = inlined_call_operand.hbm [shape: f32[16,128], index: 6, kind: output, shape index: {}]
  %s7 = sld [smem:[#allocation0]]
  $region34: #{tpu_custom_call.1} parent=0
    _
  %s9 = ssub.s32 1, %s7
  %s10 = scalar_select 0, %s9, %s7
  %s12 = sshll.u32 %s0, 4
  %s13 = int_to_ptr.vmem [resolvable:$true] %s12
  %15 = dma.vmem_to_smem %s13, 16, [#allocation3], [#allocation2]
  %s17 = sshll.u32 %s1, 4
  %s18 = int_to_ptr.vmem [resolvable:$true] %s17
  %20 = dma.vmem_to_smem %s18, 16, [#allocation4], [#allocation2]
  %21 = sst [smem:[#allocation5]] %s2
  %23 = dma.done [#allocation2], 32
  %24 = sfence
  $region1: #{tpu_custom_call.1} parent=0
    #allocation6 [shape = 'u8[8192]{0}', space=vmem, size = 0x2000, scoped, tag = 'input window, operand 3, single buffered']
    #allocation7 [shape = 's32[1]{0}', space=sflag, size = 0x4, scoped, tag = 'scoped memory for tpu_custom_call.1']
    #allocation8 [shape = 's32[1]{0}', space=sflag, size = 0x4, scoped, tag = 'scoped memory for tpu_custom_call.1']
    #allocation9 [shape = 'u8[8192]{0}', space=vmem, size = 0x2000, scoped, tag = 'input window, operand 4, single buffered']
    #allocation10 [shape = 's32[1]{0}', space=sflag, size = 0x4, scoped, tag = 'scoped memory for tpu_custom_call.1']
    #allocation11 [shape = 'u8[8192]{0}', space=vmem, size = 0x2000, scoped, tag = 'input window, operand 5, single buffered']
    #allocation12 [shape = 'u8[8192]{0}', space=vmem, size = 0x2000, scoped, tag = 'output window, operand 0, single buffered']
    %25 = vsyncpa [#allocation7], 0
    %26 = vsyncpa [#allocation10], 0
    %27 = vsyncpa [#allocation8], 0
    // Predicated region
    $region2: #{tpu_custom_call.1} parent=1 // pred_check
      _
    $region3: #{tpu_custom_call.1} parent=1 // pred_check_branch
      %29 = sbr.rel (0) target = $region5
    $region4: #{tpu_custom_call.1} parent=1 // pred_region
      %31 = vsyncadd [#allocation7], 0
      %s32 = sshll.u32 %s3, 4
      %s33 = int_to_ptr.hbm [resolvable:$true] %s32
      %s34 = sshll.u32 [#allocation6], 4
      %s35 = int_to_ptr.vmem [resolvable:$true] %s34
      %40 = dma.hbm_to_vmem [thread:$0]  %s33, 256, %s35, [#allocation7], 128, 128, 8
    $region5: #{tpu_custom_call.1} parent=1 // pred_fallthru
      _
    // Predicated region
    $region6: #{tpu_custom_call.1} parent=1 // pred_check
      _
    $region7: #{tpu_custom_call.1} parent=1 // pred_check_branch
      %42 = sbr.rel (0) target = $region9
    $region8: #{tpu_custom_call.1} parent=1 // pred_region
      %44 = vsyncadd [#allocation10], 0
      %s45 = sshll.u32 %s4, 4
      %s46 = int_to_ptr.hbm [resolvable:$true] %s45
      %s47 = sshll.u32 [#allocation9], 4
      %s48 = int_to_ptr.vmem [resolvable:$true] %s47
      %53 = dma.hbm_to_vmem [thread:$0]  %s46, 256, %s48, [#allocation10], 128, 128, 8
    $region9: #{tpu_custom_call.1} parent=1 // pred_fallthru
      _
    // Predicated region
    $region10: #{tpu_custom_call.1} parent=1 // pred_check
      _
    $region11: #{tpu_custom_call.1} parent=1 // pred_check_branch
      %55 = sbr.rel (0) target = $region13
    $region12: #{tpu_custom_call.1} parent=1 // pred_region
      %57 = vsyncadd [#allocation10], 0
      %s58 = sshll.u32 %s5, 4
      %s59 = int_to_ptr.hbm [resolvable:$true] %s58
      %s60 = sshll.u32 [#allocation11], 4
      %s61 = int_to_ptr.vmem [resolvable:$true] %s60
      %66 = dma.hbm_to_vmem [thread:$0]  %s59, 256, %s61, [#allocation10], 128, 128, 8
    $region13: #{tpu_custom_call.1} parent=1 // pred_fallthru
      _
    // Predicated region
    $region14: #{tpu_custom_call.1} parent=1 // pred_check
      _
    $region15: #{tpu_custom_call.1} parent=1 // pred_check_branch
      %68 = sbr.rel (0) target = $region17
    $region16: #{tpu_custom_call.1} parent=1 // pred_region
      %70 = dma.done [#allocation7], 256
    $region17: #{tpu_custom_call.1} parent=1 // pred_fallthru
      _
    // Predicated region
    $region18: #{tpu_custom_call.1} parent=1 // pred_check
      _
    $region19: #{tpu_custom_call.1} parent=1 // pred_check_branch
      %72 = sbr.rel (0) target = $region21
    $region20: #{tpu_custom_call.1} parent=1 // pred_region
      %74 = dma.done [#allocation10], 256
    $region21: #{tpu_custom_call.1} parent=1 // pred_fallthru
      _
    // Predicated region
    $region22: #{tpu_custom_call.1} parent=1 // pred_check
      _
    $region23: #{tpu_custom_call.1} parent=1 // pred_check_branch
      %76 = sbr.rel (0) target = $region25
    $region24: #{tpu_custom_call.1} parent=1 // pred_region
      %78 = dma.done [#allocation10], 256
    $region25: #{tpu_custom_call.1} parent=1 // pred_fallthru
      _
    %v79 = vld [vmem:[#allocation6] sm:$0xff]
    %v80 = vld [vmem:[#allocation6 + $0x8] sm:$0xff]
    %s81 = sld [smem:[#allocation5]]
    %s82 = sld [smem:[#allocation3]]
    %v83 = vstv %s82
    %v84 = vsub.f32 %v79, %v83
    %v85 = vsub.f32 %v80, %v83
    %v86 = vstv %s81
    %v87 = vmul.f32 %v86, %v84
    %v88 = vmul.f32 %v86, %v85
    %s89 = sld [smem:[#allocation4]]
    %s90 = sld [smem:[#allocation3 + $0x1]]
    %v91 = vstv %s90
    %v92 = vsub.f32 %v79, %v91
    %v93 = vsub.f32 %v80, %v91
    %v94 = vmax.f32 %v92, 0.0
    %v95 = vmax.f32 %v93, 0.0
    %v96 = vstv %s89
    %v97 = vmul.f32 %v96, %v94
    %v98 = vmul.f32 %v96, %v95
    %v99 = vadd.f32 %v87, %v97
    %v100 = vadd.f32 %v88, %v98
    %s101 = sld [smem:[#allocation4 + $0x1]]
    %s102 = sld [smem:[#allocation3 + $0x2]]
    %v103 = vstv %s102
    %v104 = vsub.f32 %v79, %v103
    %v105 = vsub.f32 %v80, %v103
    %v106 = vmax.f32 %v104, 0.0
    %v107 = vmax.f32 %v105, 0.0
    %v108 = vstv %s101
    %v109 = vmul.f32 %v108, %v106
    %v110 = vmul.f32 %v108, %v107
    %v111 = vadd.f32 %v99, %v109
    %v112 = vadd.f32 %v100, %v110
    %s113 = sld [smem:[#allocation4 + $0x2]]
    %s114 = sld [smem:[#allocation3 + $0x3]]
    %v115 = vstv %s114
    %v116 = vsub.f32 %v79, %v115
    %v117 = vsub.f32 %v80, %v115
    %v118 = vmax.f32 %v116, 0.0
    %v119 = vmax.f32 %v117, 0.0
    %v120 = vstv %s113
    %v121 = vmul.f32 %v120, %v118
    %v122 = vmul.f32 %v120, %v119
    %v123 = vadd.f32 %v111, %v121
    %v124 = vadd.f32 %v112, %v122
    %s125 = sld [smem:[#allocation4 + $0x3]]
    %s126 = sld [smem:[#allocation3 + $0x4]]
    %v127 = vstv %s126
    %v128 = vsub.f32 %v79, %v127
    %v129 = vsub.f32 %v80, %v127
    %v130 = vmax.f32 %v128, 0.0
    %v131 = vmax.f32 %v129, 0.0
    %v132 = vstv %s125
    %v133 = vmul.f32 %v132, %v130
    %v134 = vmul.f32 %v132, %v131
    %v135 = vadd.f32 %v123, %v133
    %v136 = vadd.f32 %v124, %v134
    %v137 = vld [vmem:[#allocation11] sm:$0xff]
    %v138 = vld [vmem:[#allocation11 + $0x8] sm:$0xff]
    %v139 = vld [vmem:[#allocation9] sm:$0xff]
    %v140 = vld [vmem:[#allocation9 + $0x8] sm:$0xff]
    %v141 = vmul.f32 %v137, %v139
    %v142 = vmul.f32 %v138, %v140
    %v143 = vadd.f32 %v135, %v141
    %v144 = vadd.f32 %v136, %v142
    %145 = vst [vmem:[#allocation12] sm:$0xff] %v143
    %146 = vst [vmem:[#allocation12 + $0x8] sm:$0xff] %v144
    // Predicated region
    $region26: #{tpu_custom_call.1} parent=1 // pred_check
      _
    $region27: #{tpu_custom_call.1} parent=1 // pred_check_branch
      %148 = sbr.rel (0) target = $region29
    $region28: #{tpu_custom_call.1} parent=1 // pred_region
      %150 = vsyncadd [#allocation8], 0
      %s151 = sshll.u32 [#allocation12], 4
      %s152 = int_to_ptr.vmem [resolvable:$true] %s151
      %s153 = sshll.u32 %s6, 4
      %s154 = int_to_ptr.hbm [resolvable:$true] %s153
      %159 = dma.vmem_to_hbm [thread:$0]  %s152, 256, %s154, [#allocation8], 128, 128, 8
    $region29: #{tpu_custom_call.1} parent=1 // pred_fallthru
      _
    // Predicated region
    $region30: #{tpu_custom_call.1} parent=1 // pred_check
      _
    $region31: #{tpu_custom_call.1} parent=1 // pred_check_branch
      %161 = sbr.rel (0) target = $region33
    $region32: #{tpu_custom_call.1} parent=1 // pred_region
      %163 = dma.done [#allocation8], 256
    $region33: #{tpu_custom_call.1} parent=1 // pred_fallthru
      _
    %164 = vsyncpa [#allocation7], 1
    %165 = vsyncpa [#allocation10], 1
    %166 = vsyncpa [#allocation8], 1

</llo_original>
